<compile_context>
chip_gen: v7x
topology: tpu7x:2x2x1
jax: 0.10.0
libtpu: 0.0.40
codegen_flags: <defaults>
</compile_context>

<pallas_src>
import functools

import jax
import jax.numpy as jnp
from jax.experimental import pallas as pl
from jax.experimental.pallas import tpu as pltpu


def _ce2d_kernel(x_ref, t_ref, o_ref, *, num_classes):
    """One grid step processes a (C, TR, 128) tile of logits.

    x_ref : (C, TR, 128) logits tile (any float dtype, upcast here)
    t_ref : (TR, 128)    int32 target class ids (-1 marks padding)
    o_ref : (1, 1)       float32 partial sum for this grid cell
    """
    x = x_ref[...].astype(jnp.float32)            # (C, TR, 128)
    t = t_ref[...]                                # (TR, 128) int32

    # Numerically stable log-sum-exp over the channel (leading) axis.
    # Leading-axis reductions are C-way elementwise ops on full vregs.
    m = jnp.max(x, axis=0)                        # (TR, 128)
    e = jnp.exp(x - m[None, :, :])                # (C, TR, 128)
    lse = jnp.log(jnp.sum(e, axis=0)) + m         # (TR, 128)

    # Gather logit of the target class via one-hot select over channels.
    cls_ids = jax.lax.broadcasted_iota(jnp.int32, x.shape, 0)   # (C, TR, 128)
    sel = jnp.sum(jnp.where(cls_ids == t[None, :, :], x, jnp.float32(0.0)),
                  axis=0)                         # (TR, 128)

    # NLL per pixel; padded / out-of-range targets contribute 0.
    valid = (t >= 0) & (t < num_classes)
    nll = jnp.where(valid, lse - sel, jnp.float32(0.0))

    o_ref[...] = jnp.sum(nll, axis=(0, 1), keepdims=True)


def _pick_tile_rows(num_rows, max_rows):
    """Pick TR dividing num_rows with TR % 8 == 0 (or TR == num_rows)."""
    if num_rows <= max_rows:
        return num_rows
    best = 0
    for tr in range(8, max_rows + 1, 8):
        if num_rows % tr == 0:
            best = tr
    return best  # 0 -> caller must pad so num_rows becomes a multiple of 8


def _round_up(a, b):
    return (a + b - 1) // b * b


def cross_entropy_loss_2d(inputs, targets, *,
                          max_tile_pixels=64 * 128,
                          vmem_budget_bytes=4 * 1024 * 1024):
    """inputs: (N, C, H, W) float, targets: (N, H, W) int -> scalar f32 loss.

    Equivalent to torch: NLLLoss2d(F.log_softmax(inputs, dim=1), targets)
    with weight=None, size_average=True (mean over N*H*W pixels).
    """
    N, C, H, W = inputs.shape
    assert targets.shape == (N, H, W)
    HW = H * W

    itemsize = jnp.dtype(inputs.dtype).itemsize
    # VMEM-aware cap on tile rows (single logits buffer <= budget); works on
    # v5e/v6e (128 MiB) and v7x (64 MiB) with the default 32 MiB scoped limit.
    tr_cap = min(max_tile_pixels // 128,
                 max(8, vmem_budget_bytes // (C * 128 * itemsize)))
    tr_cap = max(8, (tr_cap // 8) * 8)

    # Pixels -> (rows, 128) layout; pad only if H*W is not 128-aligned (and,
    # rarely, so that a legal tile size exists).
    hw_pad = _round_up(HW, 128)
    R = hw_pad // 128
    TR = _pick_tile_rows(R, tr_cap)
    if TR == 0:
        hw_pad = _round_up(HW, 8 * 128)
        R = hw_pad // 128
        TR = _pick_tile_rows(R, tr_cap)

    x = inputs.reshape(N, C, HW)                    # free view of NCHW
    t = targets.reshape(N, HW).astype(jnp.int32)
    if hw_pad != HW:
        x = jnp.pad(x, ((0, 0), (0, 0), (0, hw_pad - HW)))
        t = jnp.pad(t, ((0, 0), (0, hw_pad - HW)), constant_values=-1)
    x = x.reshape(N, C, R, 128)
    t = t.reshape(N, R, 128)

    num_j = R // TR
    grid = (N, num_j)

    partial = pl.pallas_call(
        functools.partial(_ce2d_kernel, num_classes=C),
        out_shape=jax.ShapeDtypeStruct((N, num_j, 1, 1), jnp.float32),
        grid_spec=pltpu.PrefetchScalarGridSpec(
            num_scalar_prefetch=0,
            grid=grid,
            in_specs=[
                pl.BlockSpec((None, C, TR, 128), lambda n, j: (n, 0, j, 0)),
                pl.BlockSpec((None, TR, 128), lambda n, j: (n, j, 0)),
            ],
            out_specs=pl.BlockSpec((None, None, 1, 1),
                                   lambda n, j: (n, j, 0, 0)),
        ),
        compiler_params=pltpu.CompilerParams(
            dimension_semantics=("parallel", "parallel"),
            vmem_limit_bytes=32 * 1024 * 1024,
        ),
    )(x, t)

    return jnp.sum(partial) / jnp.float32(N * H * W)


def _reference(inputs, targets):
    # Pure-JAX reference: mean over pixels of -log_softmax(inputs)[n, t, h, w].
    logp = jax.nn.log_softmax(inputs.astype(jnp.float32), axis=1)
    gathered = jnp.take_along_axis(logp, targets[:, None], axis=1)[:, 0]
    return -jnp.mean(gathered)


if __name__ == "__main__":
    key = jax.random.PRNGKey(0)
    k1, k2 = jax.random.split(key)

    N, C, H, W = 2, 4, 16, 16
    inputs = jax.random.normal(k1, (N, C, H, W), dtype=jnp.float32)
    targets = jax.random.randint(k2, (N, H, W), 0, C, dtype=jnp.int32)

    loss = cross_entropy_loss_2d(inputs, targets)
    jax.block_until_ready(loss)

    ref = _reference(inputs, targets)
    assert jnp.allclose(loss, ref, atol=1e-5, rtol=1e-5), (loss, ref)
    print("KERNEL_OK")
</pallas_src>

<mosaic_0001>
module attributes {stable_mosaic.version = 11 : i64} {
  func.func @_ce2d_kernel(%arg0: i32, %arg1: i32, %arg2: memref<1x4x2x128xf32, #tpu.memory_space<vmem>>, %arg3: memref<1x2x128xi32, #tpu.memory_space<vmem>>, %arg4: memref<1x1x1x1xf32, #tpu.memory_space<vmem>>) attributes {dimension_semantics = [#tpu.dimension_semantics<parallel>, #tpu.dimension_semantics<parallel>], iteration_bounds = array<i64: 2, 1>, scalar_prefetch = 0 : i64, scratch_operands = 0 : i64, tpu.core_type = #tpu.core_type<tc>, window_params = [{transform_indices = @transform_0, window_bounds = array<i64: 1, 4, 2, 128>}, {transform_indices = @transform_1, window_bounds = array<i64: 1, 2, 128>}, {transform_indices = @transform_2, window_bounds = array<i64: 1, 1, 1, 1>}]} {
    %c0 = arith.constant 0 : index
    %c0_0 = arith.constant 0 : index
    %c0_1 = arith.constant 0 : index
    %c0_2 = arith.constant 0 : index
    %0 = vector.load %arg2[%c0, %c0_0, %c0_1, %c0_2] : memref<1x4x2x128xf32, #tpu.memory_space<vmem>>, vector<1x4x2x128xf32>
    %1 = vector.shape_cast %0 : vector<1x4x2x128xf32> to vector<4x2x128xf32>
    %c0_3 = arith.constant 0 : index
    %c0_4 = arith.constant 0 : index
    %c0_5 = arith.constant 0 : index
    %2 = vector.load %arg3[%c0_3, %c0_4, %c0_5] : memref<1x2x128xi32, #tpu.memory_space<vmem>>, vector<1x2x128xi32>
    %3 = vector.shape_cast %2 : vector<1x2x128xi32> to vector<2x128xi32>
    %cst = arith.constant dense<0xFF800000> : vector<2x128xf32>
    %4 = vector.multi_reduction <maximumf>, %1, %cst [0] : vector<4x2x128xf32> to vector<2x128xf32>
    %5 = vector.shape_cast %4 : vector<2x128xf32> to vector<1x2x128xf32>
    %6 = vector.broadcast %5 : vector<1x2x128xf32> to vector<4x2x128xf32>
    %7 = arith.subf %1, %6 : vector<4x2x128xf32>
    %8 = math.exp %7 : vector<4x2x128xf32>
    %cst_6 = arith.constant dense<0.000000e+00> : vector<2x128xf32>
    %9 = vector.multi_reduction <add>, %8, %cst_6 [0] : vector<4x2x128xf32> to vector<2x128xf32>
    %10 = math.log %9 : vector<2x128xf32>
    %11 = arith.addf %10, %4 : vector<2x128xf32>
    %12 = tpu.iota {dimensions = array<i32: 0>} : vector<4x2x128xi32>
    %13 = vector.shape_cast %3 : vector<2x128xi32> to vector<1x2x128xi32>
    %14 = vector.broadcast %13 : vector<1x2x128xi32> to vector<4x2x128xi32>
    %15 = arith.cmpi eq, %12, %14 : vector<4x2x128xi32>
    %cst_7 = arith.constant 0.000000e+00 : f32
    %16 = vector.broadcast %cst_7 : f32 to vector<4x2x128xf32>
    %17 = arith.select %15, %1, %16 : vector<4x2x128xi1>, vector<4x2x128xf32>
    %cst_8 = arith.constant dense<0.000000e+00> : vector<2x128xf32>
    %18 = vector.multi_reduction <add>, %17, %cst_8 [0] : vector<4x2x128xf32> to vector<2x128xf32>
    %c0_i32 = arith.constant 0 : i32
    %19 = vector.broadcast %c0_i32 : i32 to vector<2x128xi32>
    %20 = arith.cmpi sge, %3, %19 : vector<2x128xi32>
    %c4_i32 = arith.constant 4 : i32
    %21 = vector.broadcast %c4_i32 : i32 to vector<2x128xi32>
    %22 = arith.cmpi slt, %3, %21 : vector<2x128xi32>
    %23 = arith.andi %20, %22 : vector<2x128xi1>
    %24 = arith.subf %11, %18 : vector<2x128xf32>
    %cst_9 = arith.constant 0.000000e+00 : f32
    %25 = vector.broadcast %cst_9 : f32 to vector<2x128xf32>
    %26 = arith.select %23, %24, %25 : vector<2x128xi1>, vector<2x128xf32>
    %27 = vector.shape_cast %26 : vector<2x128xf32> to vector<1x2x128xf32>
    %cst_10 = arith.constant dense<0.000000e+00> : vector<1xf32>
    %28 = vector.multi_reduction <add>, %27, %cst_10 [1, 2] : vector<1x2x128xf32> to vector<1xf32>
    %29 = vector.shape_cast %28 : vector<1xf32> to vector<1x1x1xf32>
    %30 = vector.extract %29[0, 0, 0] : f32 from vector<1x1x1xf32>
    %31 = vector.broadcast %30 : f32 to vector<1x1xf32>
    %c0_11 = arith.constant 0 : index
    %c0_12 = arith.constant 0 : index
    %c0_13 = arith.constant 0 : index
    %c0_14 = arith.constant 0 : index
    %32 = vector.load %arg4[%c0_11, %c0_12, %c0_13, %c0_14] : memref<1x1x1x1xf32, #tpu.memory_space<vmem>>, vector<1x1x1x1xf32>
    %33 = vector.shape_cast %32 : vector<1x1x1x1xf32> to vector<1x1xf32>
    %34 = vector.shape_cast %31 : vector<1x1xf32> to vector<1x1x1x1xf32>
    tpu.vector_store %arg4[%c0_11, %c0_12, %c0_13, %c0_14], %34 {strides = array<i32>} : memref<1x1x1x1xf32, #tpu.memory_space<vmem>>, vector<1x1x1x1xf32>,
    return
  }
  func.func @transform_0(%arg0: i32, %arg1: i32) -> (i32, i32, i32, i32) {
    %c0_i32 = arith.constant 0 : i32
    %c0_i32_0 = arith.constant 0 : i32
    %c0_i32_1 = arith.constant 0 : i32
    return %arg0, %c0_i32, %arg1, %c0_i32_0 : i32, i32, i32, i32
  }
  func.func @transform_1(%arg0: i32, %arg1: i32) -> (i32, i32, i32) {
    %c0_i32 = arith.constant 0 : i32
    %c0_i32_0 = arith.constant 0 : i32
    return %arg0, %arg1, %c0_i32 : i32, i32, i32
  }
  func.func @transform_2(%arg0: i32, %arg1: i32) -> (i32, i32, i32, i32) {
    %c0_i32 = arith.constant 0 : i32
    %c0_i32_0 = arith.constant 0 : i32
    %c0_i32_1 = arith.constant 0 : i32
    return %arg0, %arg1, %c0_i32, %c0_i32_0 : i32, i32, i32, i32
  }
}

</mosaic_0001>

<llo_original>
// kernel: tpu_custom_call.1
$region0: #{tpu_custom_call.1}
  #allocation0 [shape = 'u32[]', space=smem, size = 0x4, offset = 0x4, fixed_abs, tag = 'smem constant byte address 0x4 - core index']
  #allocation1 [shape = 'u32[144,128]{1,0:T(1,128)}', space=vmem, size = 0x12000, scoped, tag = 'internal scratch']
  %s0 = inlined_call_operand.hbm [shape: f32[2,4,2,128], index: 0, kind: input, shape index: {}]
  %s1 = inlined_call_operand.hbm [shape: s32[2,2,128], index: 1, kind: input, shape index: {}]
  %s2 = inlined_call_operand.vmem [shape: f32[2,1,1,1], index: 2, kind: output, shape index: {}]
  %s3 = sld [smem:[#allocation0]]
  $region49: #{tpu_custom_call.1} parent=0
    _
  %s5 = ssub.s32 1, %s3
  %s6 = scalar_select 0, %s5, %s3
  $region1: #{tpu_custom_call.1} parent=0
    #allocation2 [shape = 'u8[8192]{0}', space=vmem, size = 0x2000, scoped, tag = 'input window, operand 0']
    #allocation3 [shape = 's32[2]{0}', space=sflag, size = 0x8, scoped, tag = 'scoped memory for tpu_custom_call.1']
    #allocation4 [shape = 'u8[2048]{0}', space=vmem, size = 0x800, scoped, tag = 'input window, operand 1']
    #allocation5 [shape = 's32[2]{0}', space=sflag, size = 0x8, scoped, tag = 'scoped memory for tpu_custom_call.1']
    %7 = vsyncpa [#allocation3], 0
    %s8 = scalar_lea.sflag [#allocation3], 1
    %9 = vsyncpa %s8, 0
    %10 = vsyncpa [#allocation5], 0
    %s11 = scalar_lea.sflag [#allocation5], 1
    %12 = vsyncpa %s11, 0
    loop: start=0, step=1, limit=4
    $region2: #{tpu_custom_call.1} parent=1 // loop_pre_header
      _
    $region3: #{tpu_custom_call.1} parent=1 // loop_header
      %s14 = sphi 0, %s18
      %p15 = scmp.ge.s32.totalorder %s14, 4
      %s21 = sphi 0, %s33
      %s22 = sphi 0, %s29
      %s23 = sphi 0, %s21
      %s24 = sphi 0, %s22
      %s25 = sphi 0, %s23
      %s26 = sphi 0, %s24
      %s38 = sphi 0, %s40
      %s41 = sphi 0, %s38
      %s42 = sphi 0, %s41
      %s58 = sphi 0, %s42
      %s66 = sphi 0, %s68
      %s69 = sphi 0, %s66
      %s70 = sphi 0, %s69
      %s86 = sphi 0, %s70
      %s94 = sphi 0, %s96
      %s97 = sphi 0, %s94
      %s98 = sphi 0, %s97
      %s114 = sphi 0, %s98
    $region4: #{tpu_custom_call.1} parent=1 // loop_header_branch
      %17 = sbr.rel (%p15) target = $region8
    $region5: #{tpu_custom_call.1} parent=1 // loop_body
      %s19 = ssub.s32 %s14, 1
      %s20 = ssub.s32 %s14, 2
      %s27 = sadd.s32 1, %s22
      %p28 = scmp.ge.s32.totalorder %s27, 1
      %s29 = scalar_select %p28, 0, %s27
      %s30 = sadd.s32 1, %s21
      %s31 = scalar_select %p28, %s30, %s21
      %p32 = scmp.ge.s32.totalorder %s31, 2
      %s33 = scalar_select %p32, 0, %s31
      %s34 = ssub.s32 %s21, %s33
      %s35 = ssub.s32 %s22, %s29
      %s36 = sor.u32 %s34, %s35
      %p37 = scmp.eq.s32.totalorder %s36, 0
      %s39 = sadd.s32 %s38, 1
      %s40 = scalar_select %p37, %s38, %s39
      %p43 = pneg %p37
      %p44 = scmp.eq.s32.totalorder %s14, 1
      %p45 = por %p43, %p44
      %p46 = scmp.ne.s32.totalorder %s38, %s41
      %p47 = scmp.eq.s32.totalorder %s14, 0
      %p48 = por %p46, %p47
      %p49 = scmp.ne.s32.totalorder %s38, %s41
      %p50 = scmp.eq.s32.totalorder %s19, 1
      %p51 = por %p49, %p50
      %p52 = scmp.ne.s32.totalorder %s41, %s42
      %p53 = scmp.eq.s32.totalorder %s19, 0
      %p54 = por %p52, %p53
      %p55 = scmp.ne.s32.totalorder %s41, %s42
      %p56 = scmp.eq.s32.totalorder %s20, 1
      %p57 = por %p55, %p56
      %p59 = scmp.ne.s32.totalorder %s42, %s58
      %p60 = scmp.eq.s32.totalorder %s20, 0
      %p61 = por %p59, %p60
      %s62 = ssub.s32 %s21, %s33
      %s63 = ssub.s32 %s22, %s29
      %s64 = sor.u32 %s62, %s63
      %p65 = scmp.eq.s32.totalorder %s64, 0
      %s67 = sadd.s32 %s66, 1
      %s68 = scalar_select %p65, %s66, %s67
      %p71 = pneg %p65
      %p72 = scmp.eq.s32.totalorder %s14, 1
      %p73 = por %p71, %p72
      %p74 = scmp.ne.s32.totalorder %s66, %s69
      %p75 = scmp.eq.s32.totalorder %s14, 0
      %p76 = por %p74, %p75
      %p77 = scmp.ne.s32.totalorder %s66, %s69
      %p78 = scmp.eq.s32.totalorder %s19, 1
      %p79 = por %p77, %p78
      %p80 = scmp.ne.s32.totalorder %s69, %s70
      %p81 = scmp.eq.s32.totalorder %s19, 0
      %p82 = por %p80, %p81
      %p83 = scmp.ne.s32.totalorder %s69, %s70
      %p84 = scmp.eq.s32.totalorder %s20, 1
      %p85 = por %p83, %p84
      %p87 = scmp.ne.s32.totalorder %s70, %s86
      %p88 = scmp.eq.s32.totalorder %s20, 0
      %p89 = por %p87, %p88
      %s90 = ssub.s32 %s21, %s33
      %s91 = ssub.s32 %s22, %s29
      %s92 = sor.u32 %s90, %s91
      %p93 = scmp.eq.s32.totalorder %s92, 0
      %s95 = sadd.s32 %s94, 1
      %s96 = scalar_select %p93, %s94, %s95
      %p99 = pneg %p93
      %p100 = scmp.eq.s32.totalorder %s14, 1
      %p101 = por %p99, %p100
      %p102 = scmp.ne.s32.totalorder %s94, %s97
      %p103 = scmp.eq.s32.totalorder %s14, 0
      %p104 = por %p102, %p103
      %p105 = scmp.ne.s32.totalorder %s94, %s97
      %p106 = scmp.eq.s32.totalorder %s19, 1
      %p107 = por %p105, %p106
      %p108 = scmp.ne.s32.totalorder %s97, %s98
      %p109 = scmp.eq.s32.totalorder %s19, 0
      %p110 = por %p108, %p109
      %p111 = scmp.ne.s32.totalorder %s97, %s98
      %p112 = scmp.eq.s32.totalorder %s20, 1
      %p113 = por %p111, %p112
      %p115 = scmp.ne.s32.totalorder %s98, %s114
      %p116 = scmp.eq.s32.totalorder %s20, 0
      %p117 = por %p115, %p116
      %p118 = scmp.le.s32.totalorder 1, %s14
      %p119 = scmp.lt.s32.totalorder %s14, 3
      %p120 = pnand %p118, %p119
      %p121 = pneg %p120
      // Predicated region
      $region9: #{tpu_custom_call.1} parent=5 // pred_check
        _
      $region10: #{tpu_custom_call.1} parent=5 // pred_check_branch
        %123 = sbr.rel (%p120) target = $region12
      $region11: #{tpu_custom_call.1} parent=5 // pred_region
        %s124 = ssub.s32 %s14, 1
      $region12: #{tpu_custom_call.1} parent=5 // pred_fallthru
        _
      %p125 = scmp.lt.s32.totalorder %s14, 2
      // Predicated region
      $region13: #{tpu_custom_call.1} parent=5 // pred_check
        %p126 = pneg %p125
      $region14: #{tpu_custom_call.1} parent=5 // pred_check_branch
        %128 = sbr.rel (%p126) target = $region16
      $region15: #{tpu_custom_call.1} parent=5 // pred_region
        // Predicated region
        $region17: #{tpu_custom_call.1} parent=15 // pred_check
          %p129 = pneg %p48
        $region18: #{tpu_custom_call.1} parent=15 // pred_check_branch
          %131 = sbr.rel (%p129) target = $region20
        $region19: #{tpu_custom_call.1} parent=15 // pred_region
          %s132 = sand.u32 %s38, 1
          %s133 = scalar_lea.sflag [#allocation3], %s132
          %s134 = sand.u32 %s38, 1
          %s135 = smul.addr %s134, 8
          %s136 = scalar_lea.vmem [#allocation2], %s135
          %s138 = ssub.s32 128, 128
          %139 = vsyncadd %s133, %s138
          %s140 = smul.addr %s21, 4
          %s141 = sadd.s32 %s22, %s140
          %s142 = smul.addr %s141, 32
          %s143 = scalar_lea.hbm %s0, %s142
          %s144 = sshll.u32 %s136, 4
          %s145 = int_to_ptr.vmem [resolvable:$true] %s144
          %150 = dma.hbm_to_vmem [thread:$0]  %s143, 128, %s145, %s133, 32, 32, 2
        $region20: #{tpu_custom_call.1} parent=15 // pred_fallthru
          _
        // Predicated region
        $region21: #{tpu_custom_call.1} parent=15 // pred_check
          %p151 = pneg %p76
        $region22: #{tpu_custom_call.1} parent=15 // pred_check_branch
          %153 = sbr.rel (%p151) target = $region24
        $region23: #{tpu_custom_call.1} parent=15 // pred_region
          %s154 = sand.u32 %s66, 1
          %s155 = scalar_lea.sflag [#allocation5], %s154
          %s156 = sand.u32 %s66, 1
          %s157 = smul.addr %s156, 2
          %s158 = scalar_lea.vmem [#allocation4], %s157
          %s160 = ssub.s32 32, 32
          %161 = vsyncadd %s155, %s160
          %s162 = sadd.s32 %s22, %s21
          %s163 = smul.addr %s162, 32
          %s164 = scalar_lea.hbm %s1, %s163
          %s166 = sshll.u32 %s158, 4
          %s167 = int_to_ptr.vmem [resolvable:$true] %s166
          %169 = dma.hbm_to_vmem [thread:$0]  %s164, 32, %s167, %s155
        $region24: #{tpu_custom_call.1} parent=15 // pred_fallthru
          _
      $region16: #{tpu_custom_call.1} parent=5 // pred_fallthru
        _
      %p170 = scmp.le.s32.totalorder 1, %s14
      %p171 = scmp.lt.s32.totalorder %s14, 3
      %p172 = pnand %p170, %p171
      %p173 = pneg %p172
      // Predicated region
      $region25: #{tpu_custom_call.1} parent=5 // pred_check
        _
      $region26: #{tpu_custom_call.1} parent=5 // pred_check_branch
        %175 = sbr.rel (%p172) target = $region28
      $region27: #{tpu_custom_call.1} parent=5 // pred_region
        %s176 = ssub.s32 %s14, 1
        %s177 = sand.u32 %s41, 1
        %s178 = scalar_lea.sflag [#allocation3], %s177
        %s179 = sand.u32 %s41, 1
        %s180 = smul.addr %s179, 8
        %s181 = scalar_lea.vmem [#allocation2], %s180
        // Predicated region
        $region29: #{tpu_custom_call.1} parent=27 // pred_check
          %p182 = pneg %p54
        $region30: #{tpu_custom_call.1} parent=27 // pred_check_branch
          %184 = sbr.rel (%p182) target = $region32
        $region31: #{tpu_custom_call.1} parent=27 // pred_region
          %185 = dma.done %s178, 128
        $region32: #{tpu_custom_call.1} parent=27 // pred_fallthru
          _
        %s186 = sand.u32 %s69, 1
        %s187 = scalar_lea.sflag [#allocation5], %s186
        %s188 = sand.u32 %s69, 1
        %s189 = smul.addr %s188, 2
        %s190 = scalar_lea.vmem [#allocation4], %s189
        // Predicated region
        $region33: #{tpu_custom_call.1} parent=27 // pred_check
          %p191 = pneg %p82
        $region34: #{tpu_custom_call.1} parent=27 // pred_check_branch
          %193 = sbr.rel (%p191) target = $region36
        $region35: #{tpu_custom_call.1} parent=27 // pred_region
          %194 = dma.done %s187, 32
        $region36: #{tpu_custom_call.1} parent=27 // pred_fallthru
          _
        %s195 = sand.u32 %s41, 1
        %s196 = scalar_lea.sflag [#allocation3], %s195
        %s197 = sand.u32 %s41, 1
        %s198 = smul.addr %s197, 8
        %s199 = scalar_lea.vmem [#allocation2], %s198
        %p200 = pneg %p54
        %p201 = pneg %p51
        %s202 = sand.u32 %s69, 1
        %s203 = scalar_lea.sflag [#allocation5], %s202
        %s204 = sand.u32 %s69, 1
        %s205 = smul.addr %s204, 2
        %s206 = scalar_lea.vmem [#allocation4], %s205
        %p207 = pneg %p82
        %p208 = pneg %p79
        %p209 = pneg %p110
        %p210 = pneg %p107
        %p211 = scmp.lt.s32.totalorder %s23, 1
        %s212 = scalar_select %p211, %s23, 1
        %p213 = scmp.lt.s32.totalorder %s24, 0
        %s214 = scalar_select %p213, %s24, 0
        %s215 = sadd.s32 %s214, %s212
        %s216 = scalar_lea.vmem %s2, %s215
        %p217 = scmp.lt.s32.totalorder %s23, 1
        %s218 = scalar_select %p217, %s23, 1
        %p219 = scmp.lt.s32.totalorder %s24, 0
        %s220 = scalar_select %p219, %s24, 0
        %s221 = sadd.s32 %s220, %s218
        %s222 = scalar_lea.vmem %s2, %s221
        %v223 = vld [vmem:[%s181] sm:$0x3]
        %v224 = vld [vmem:[%s181 + $0x2] sm:$0x3]
        %v225 = vld [vmem:[%s181 + $0x4] sm:$0x3]
        %v226 = vld [vmem:[%s181 + $0x6] sm:$0x3]
        %v227 = vld [vmem:[%s190] sm:$0x3]
        %vm228 = vcmask 1041408
        %v229 = vsel %vm228, %v223, -inf
        %v230 = vsel %vm228, %v224, -inf
        %v231 = vsel %vm228, %v225, -inf
        %v232 = vsel %vm228, %v226, -inf
        %v233 = vmax.f32 %v229, %v230
        %v234 = vmax.f32 %v231, %v232
        %v235 = vmax.f32 %v233, %v234
        %v236 = vsub.f32 %v223, %v235
        %v237 = vsub.f32 %v224, %v235
        %v238 = vsub.f32 %v225, %v235
        %v239 = vsub.f32 %v226, %v235
        %v240 = vmul.f32 %v236, 1.442695
        %v241 = vpow.pop %v240
        %v242 = vmul.f32 %v237, 1.442695
        %v243 = vpow.pop %v242
        %v244 = vmul.f32 %v238, 1.442695
        %v245 = vpow.pop %v244
        %v246 = vmul.f32 %v239, 1.442695
        %v247 = vpow.pop %v246
        %v248 = vsel %vm228, %v241, 0.0
        %v249 = vsel %vm228, %v243, 0.0
        %v250 = vadd.f32 %v248, %v249
        %v251 = vsel %vm228, %v245, 0.0
        %v252 = vadd.f32 %v250, %v251
        %v253 = vsel %vm228, %v247, 0.0
        %v254 = vadd.f32 %v252, %v253
        %v255 = vlog2.pop %v254
        %v256 = vmul.f32 %v255, 0.6931472
        %v257 = vadd.f32 %v256, %v235
        %vm258 = vcmp.eq.s32.totalorder %v227, 0
        %vm259 = vcmp.eq.s32.totalorder %v227, 1
        %vm260 = vcmp.eq.s32.totalorder %v227, 2
        %vm261 = vcmp.eq.s32.totalorder %v227, 3
        %v262 = vsel %vm258, %v223, 0.0
        %v263 = vsel %vm259, %v224, 0.0
        %v264 = vsel %vm260, %v225, 0.0
        %v265 = vsel %vm261, %v226, 0.0
        %v266 = vsel %vm228, %v262, 0.0
        %v267 = vsel %vm228, %v263, 0.0
        %v268 = vadd.f32 %v266, %v267
        %v269 = vsel %vm228, %v264, 0.0
        %v270 = vadd.f32 %v268, %v269
        %v271 = vsel %vm228, %v265, 0.0
        %v272 = vadd.f32 %v270, %v271
        %vm273 = vcmp.ge.s32.totalorder %v227, 0
        %vm274 = vcmp.lt.s32.totalorder %v227, 4
        %vm275 = vmand %vm273, %vm274
        %v276 = vsub.f32 %v257, %v272
        %v277 = vsel %vm275, %v276, 0.0
        %v278 = vsel %vm228, %v277, 0.0
        %279 = vadd.xlane.f32.xlu0 %v278
        %v280 = vpop.xlane.xlu0 %279
        %v281 = vrot.slane %v280, 4
        %v282 = vadd.f32 %v280, %v281
        %v283 = vrot.slane %v282, 2
        %v284 = vadd.f32 %v282, %v283
        %v285 = vrot.slane %v284, 1
        %v286 = vadd.f32 %v284, %v285
        %s287 = vtos %v286
        %v288 = vstv %s287
        %vm289 = vcmask 0
        %290 = vst.msk [vmem:[%s222] sm:$0x1] %vm289, %v288
        %p291 = scmp.lt.s32.totalorder %s23, 1
        %s292 = scalar_select %p291, %s23, 1
        %p293 = scmp.lt.s32.totalorder %s24, 0
        %s294 = scalar_select %p293, %s24, 0
        %s295 = sadd.s32 %s294, %s292
        %s296 = scalar_lea.vmem %s2, %s295
        // Predicated region
        $region37: #{tpu_custom_call.1} parent=27 // pred_check
          %p297 = pneg %p107
        $region38: #{tpu_custom_call.1} parent=27 // pred_check_branch
          %299 = sbr.rel (%p297) target = $region40
        $region39: #{tpu_custom_call.1} parent=27 // pred_region
          _
        $region40: #{tpu_custom_call.1} parent=27 // pred_fallthru
          _
      $region28: #{tpu_custom_call.1} parent=5 // pred_fallthru
        _
      %p300 = scmp.le.s32.totalorder 2, %s14
      // Predicated region
      $region41: #{tpu_custom_call.1} parent=5 // pred_check
        %p301 = pneg %p300
      $region42: #{tpu_custom_call.1} parent=5 // pred_check_branch
        %303 = sbr.rel (%p301) target = $region44
      $region43: #{tpu_custom_call.1} parent=5 // pred_region
        %s304 = ssub.s32 %s14, 2
        // Predicated region
        $region45: #{tpu_custom_call.1} parent=43 // pred_check
          %p305 = pneg %p113
        $region46: #{tpu_custom_call.1} parent=43 // pred_check_branch
          %307 = sbr.rel (%p305) target = $region48
        $region47: #{tpu_custom_call.1} parent=43 // pred_region
          %p308 = scmp.lt.s32.totalorder %s25, 1
          %s309 = scalar_select %p308, %s25, 1
          %p310 = scmp.lt.s32.totalorder %s26, 0
          %s311 = scalar_select %p310, %s26, 0
          %s312 = sadd.s32 %s311, %s309
          %s313 = scalar_lea.vmem %s2, %s312
        $region48: #{tpu_custom_call.1} parent=43 // pred_fallthru
          _
      $region44: #{tpu_custom_call.1} parent=5 // pred_fallthru
        _
    $region6: #{tpu_custom_call.1} parent=1 // loop_footer
      %s18 = sadd.s32 1, %s14
    $region7: #{tpu_custom_call.1} parent=1 // loop_footer_branch
      %13 = sbr.rel target = $region3
    $region8: #{tpu_custom_call.1} parent=1 // loop_exit
      _
    %314 = vsyncpa [#allocation3], 1
    %s315 = scalar_lea.sflag [#allocation3], 1
    %316 = vsyncpa %s315, 1
    %317 = vsyncpa [#allocation5], 1
    %s318 = scalar_lea.sflag [#allocation5], 1
    %319 = vsyncpa %s318, 1

</llo_original>
